<compile_context>
chip_gen: v6e
topology: v6e:2x2x1
jax: 0.10.0
libtpu: 0.0.40
codegen_flags: <defaults>
</compile_context>

<pallas_src>
import functools

import jax
import jax.numpy as jnp
from jax.experimental import pallas as pl
from jax.experimental.pallas import tpu as pltpu


def _round_up(a, b):
    return (a + b - 1) // b * b


def _focal_kernel(x_ref, t_ref, out_ref, acc_ref, *, gamma, actual_n,
                  batch_tile, n_steps, needs_mask):
    p = pl.program_id(0)   # parallel axis (feeds both TCs on dual-TC chips)
    s = pl.program_id(1)   # batch-reduction steps (minor-most, "arbitrary")

    @pl.when(s == 0)
    def _():
        acc_ref[...] = jnp.zeros_like(acc_ref)

    # Upcast inside the kernel (inputs may be streamed as bf16).
    x = x_ref[...].astype(jnp.float32)
    t = t_ref[...].astype(jnp.float32)

    # Numerically stable BCE-with-logits, written exactly like the PyTorch code.
    max_val = jnp.maximum(-x, 0.0)
    bce = x - x * t + max_val + jnp.log(jnp.exp(-max_val) + jnp.exp(-x - max_val))

    # invprobs = logsigmoid(-x * sign),  sign = (t > 0.5) * 2 - 1
    z = -x * ((t > 0.5).astype(jnp.float32) * 2.0 - 1.0)
    invprobs = jnp.minimum(z, 0.0) - jnp.log(1.0 + jnp.exp(-jnp.abs(z)))

    focal = jnp.exp(invprobs * gamma) * bce

    if needs_mask:
        # Zero out padded tail rows (static Python flag -> no cost when N fits).
        row0 = (p * n_steps + s) * batch_tile
        rows = row0 + jax.lax.broadcasted_iota(jnp.int32, focal.shape, 0)
        focal = jnp.where(rows < actual_n, focal, 0.0)

    # Per-class partial sums over this batch tile (f32 accumulation).
    acc_ref[...] += jnp.sum(focal, axis=0, keepdims=True)

    @pl.when(s == n_steps - 1)
    def _():
        out_ref[...] = acc_ref[...].reshape(out_ref.shape)


def focal_loss(inputs, targets, weight=None, gamma=2.0, *,
               batch_tile=None, num_parallel=None,
               vmem_limit_bytes=32 * 1024 * 1024):
    """Pallas TPU implementation of FocalLoss.forward.

    inputs, targets: (N, C) logits / soft targets (f32 or bf16).
    weight: optional (C,) class weights (normalized internally, like __init__).
    Returns a scalar float32 loss.
    """
    if targets.shape != inputs.shape:
        raise ValueError(
            f"Target size ({targets.shape}) must be the same as input size "
            f"({inputs.shape})")
    N, C = inputs.shape

    isz_x = jnp.dtype(inputs.dtype).itemsize
    isz_t = jnp.dtype(targets.dtype).itemsize
    # Minimum sublane multiple for the narrower streamed dtype
    # (8 for f32, 16 for bf16, 32 for int8).
    sublane = max(8, 32 // min(isz_x, isz_t))

    if num_parallel is None:
        # Size-2 leading "parallel" axis: sharded across the two TensorCores on
        # v7x; on single-TC v5e/v6e it is just two sequential outer iterations.
        num_parallel = 2 if N >= 2 * sublane else 1

    rows_per_par = -(-N // num_parallel)

    if batch_tile is None:
        # Keep 2 inputs x 2 pipeline buffers x tile x C comfortably inside the
        # scoped-VMEM budget on every generation (v7x only has 64 MiB physical).
        budget_bytes = 8 * 1024 * 1024
        tile_cap = max(sublane,
                       (budget_bytes // (2 * C * (isz_x + isz_t))) // sublane * sublane)
        batch_tile = min(tile_cap, 2048, _round_up(rows_per_par, sublane))
    batch_tile = max(sublane, _round_up(batch_tile, sublane))

    n_steps = -(-rows_per_par // batch_tile)
    n_pad = num_parallel * n_steps * batch_tile

    x, t = inputs, targets
    if n_pad != N:
        x = jnp.pad(x, ((0, n_pad - N), (0, 0)))
        t = jnp.pad(t, ((0, n_pad - N), (0, 0)))

    kernel = functools.partial(
        _focal_kernel, gamma=float(gamma), actual_n=N, batch_tile=batch_tile,
        n_steps=n_steps, needs_mask=(n_pad != N))

    cost = pl.CostEstimate(
        flops=int(20 * N * C),
        transcendentals=int(6 * N * C),
        bytes_accessed=int(N * C * (isz_x + isz_t) + num_parallel * C * 4),
    )

    partials = pl.pallas_call(
        kernel,
        out_shape=jax.ShapeDtypeStruct((num_parallel, 1, C), jnp.float32),
        grid_spec=pltpu.PrefetchScalarGridSpec(
            num_scalar_prefetch=0,
            grid=(num_parallel, n_steps),
            in_specs=[
                pl.BlockSpec((batch_tile, C), lambda p, s: (p * n_steps + s, 0)),
                pl.BlockSpec((batch_tile, C), lambda p, s: (p * n_steps + s, 0)),
            ],
            out_specs=pl.BlockSpec((1, 1, C), lambda p, s: (p, 0, 0)),
            scratch_shapes=[pltpu.VMEM((1, C), jnp.float32)],
        ),
        compiler_params=pltpu.CompilerParams(
            dimension_semantics=("parallel", "arbitrary"),
            vmem_limit_bytes=vmem_limit_bytes,
        ),
        cost_estimate=cost,
    )(x, t)

    # Tiny epilogue (C elements): class weighting + mean over the batch.
    if weight is None:
        w = jnp.full((C,), 1.0 / C, dtype=jnp.float32)
    else:
        w = jnp.asarray(weight, dtype=jnp.float32)
        w = w / w.sum()
    per_class = partials.sum(axis=(0, 1))      # (C,)
    return jnp.sum(per_class * w) / N


def _focal_loss_ref(x, t, weight=None, gamma=2.0):
    """Pure-JAX reference mirroring the PyTorch forward."""
    x = x.astype(jnp.float32)
    t = t.astype(jnp.float32)
    max_val = jnp.maximum(-x, 0.0)
    loss = x - x * t + max_val + jnp.log(jnp.exp(-max_val) + jnp.exp(-x - max_val))
    invprobs = jax.nn.log_sigmoid(-x * ((t > 0.5).astype(jnp.float32) * 2.0 - 1.0))
    loss = jnp.exp(invprobs * gamma) * loss
    if weight is None:
        loss = loss / x.shape[1]
    else:
        w = jnp.asarray(weight, jnp.float32)
        loss = loss * (w / w.sum()).reshape(1, -1)
    return loss.sum(axis=1).mean()


if __name__ == "__main__":
    key = jax.random.PRNGKey(0)
    k1, k2, k3, k4 = jax.random.split(key, 4)

    # Small shapes implied by the module: (batch, classes) logits/targets.
    N, C = 16, 8
    logits = jax.random.normal(k1, (N, C), dtype=jnp.float32) * 2.0
    targets = (jax.random.uniform(k2, (N, C)) > 0.5).astype(jnp.float32)
    weight = jnp.arange(1, C + 1, dtype=jnp.float32)

    # weighted
    out_w = jax.block_until_ready(focal_loss(logits, targets, weight=weight, gamma=2.0))
    ref_w = _focal_loss_ref(logits, targets, weight=weight, gamma=2.0)
    assert jnp.allclose(out_w, ref_w, atol=1e-5, rtol=1e-5), (out_w, ref_w)

    # unweighted (weight=None branch)
    out_u = jax.block_until_ready(focal_loss(logits, targets, weight=None, gamma=2.0))
    ref_u = _focal_loss_ref(logits, targets, weight=None, gamma=2.0)
    assert jnp.allclose(out_u, ref_u, atol=1e-5, rtol=1e-5), (out_u, ref_u)

    # ragged batch (exercises padding + in-kernel tail masking)
    N2 = 20
    logits2 = jax.random.normal(k3, (N2, C), dtype=jnp.float32)
    targets2 = (jax.random.uniform(k4, (N2, C)) > 0.5).astype(jnp.float32)
    out_r = jax.block_until_ready(focal_loss(logits2, targets2, weight=weight, gamma=2.0))
    ref_r = _focal_loss_ref(logits2, targets2, weight=weight, gamma=2.0)
    assert jnp.allclose(out_r, ref_r, atol=1e-5, rtol=1e-5), (out_r, ref_r)

    # bf16 streaming path (half the HBM bytes; upcast to f32 inside the kernel)
    N3, C3 = 64, 128
    kb1, kb2 = jax.random.split(k3)
    logits3 = jax.random.normal(kb1, (N3, C3), dtype=jnp.float32).astype(jnp.bfloat16)
    targets3 = (jax.random.uniform(kb2, (N3, C3)) > 0.5).astype(jnp.bfloat16)
    out_b = jax.block_until_ready(focal_loss(logits3, targets3, weight=None, gamma=2.0))
    ref_b = _focal_loss_ref(logits3, targets3, weight=None, gamma=2.0)
    assert jnp.allclose(out_b, ref_b, atol=1e-4, rtol=1e-4), (out_b, ref_b)

    print("KERNEL_OK")
</pallas_src>

<mosaic_0001>
module attributes {stable_mosaic.version = 11 : i64} {
  func.func @_focal_kernel(%arg0: i32, %arg1: i32, %arg2: memref<8x8xf32, #tpu.memory_space<vmem>>, %arg3: memref<8x8xf32, #tpu.memory_space<vmem>>, %arg4: memref<1x1x8xf32, #tpu.memory_space<vmem>>, %arg5: memref<1x8xf32, #tpu.memory_space<vmem>>) attributes {dimension_semantics = [#tpu.dimension_semantics<parallel>, #tpu.dimension_semantics<arbitrary>], iteration_bounds = array<i64: 2, 1>, scalar_prefetch = 0 : i64, scratch_operands = 1 : i64, tpu.core_type = #tpu.core_type<tc>, window_params = [{transform_indices = @transform_0, window_bounds = array<i64: 8, 8>}, {transform_indices = @transform_1, window_bounds = array<i64: 8, 8>}, {transform_indices = @transform_2, window_bounds = array<i64: 1, 1, 8>}]} {
    %c0_i32 = arith.constant 0 : i32
    %0 = arith.cmpi eq, %arg1, %c0_i32 : i32
    %1 = arith.extui %0 : i1 to i32
    %c0_i32_0 = arith.constant 0 : i32
    %2 = arith.cmpi ne, %1, %c0_i32_0 : i32
    scf.if %2 {
      %cst_22 = arith.constant 0.000000e+00 : f32
      %55 = vector.broadcast %cst_22 : f32 to vector<1x8xf32>
      %c0_23 = arith.constant 0 : index
      %c0_24 = arith.constant 0 : index
      %56 = vector.load %arg5[%c0_23, %c0_24] : memref<1x8xf32, #tpu.memory_space<vmem>>, vector<1x8xf32>
      tpu.vector_store %arg5[%c0_23, %c0_24], %55 {strides = array<i32>} : memref<1x8xf32, #tpu.memory_space<vmem>>, vector<1x8xf32>,
    } else {
    }
    %c0 = arith.constant 0 : index
    %c0_1 = arith.constant 0 : index
    %3 = vector.load %arg2[%c0, %c0_1] : memref<8x8xf32, #tpu.memory_space<vmem>>, vector<8x8xf32>
    %c0_2 = arith.constant 0 : index
    %c0_3 = arith.constant 0 : index
    %4 = vector.load %arg3[%c0_2, %c0_3] : memref<8x8xf32, #tpu.memory_space<vmem>>, vector<8x8xf32>
    %cst = arith.constant 0.000000e+00 : f32
    %5 = vector.broadcast %cst : f32 to vector<8x8xf32>
    %6 = arith.subf %5, %3 : vector<8x8xf32>
    %cst_4 = arith.constant 0.000000e+00 : f32
    %7 = vector.broadcast %cst_4 : f32 to vector<8x8xf32>
    %8 = arith.maximumf %6, %7 : vector<8x8xf32>
    %9 = arith.mulf %3, %4 : vector<8x8xf32>
    %10 = arith.subf %3, %9 : vector<8x8xf32>
    %11 = arith.addf %10, %8 : vector<8x8xf32>
    %cst_5 = arith.constant 0.000000e+00 : f32
    %12 = vector.broadcast %cst_5 : f32 to vector<8x8xf32>
    %13 = arith.subf %12, %8 : vector<8x8xf32>
    %14 = math.exp %13 : vector<8x8xf32>
    %cst_6 = arith.constant 0.000000e+00 : f32
    %15 = vector.broadcast %cst_6 : f32 to vector<8x8xf32>
    %16 = arith.subf %15, %3 : vector<8x8xf32>
    %17 = arith.subf %16, %8 : vector<8x8xf32>
    %18 = math.exp %17 : vector<8x8xf32>
    %19 = arith.addf %14, %18 : vector<8x8xf32>
    %20 = math.log %19 : vector<8x8xf32>
    %21 = arith.addf %11, %20 : vector<8x8xf32>
    %cst_7 = arith.constant 0.000000e+00 : f32
    %22 = vector.broadcast %cst_7 : f32 to vector<8x8xf32>
    %23 = arith.subf %22, %3 : vector<8x8xf32>
    %cst_8 = arith.constant 5.000000e-01 : f32
    %24 = vector.broadcast %cst_8 : f32 to vector<8x8xf32>
    %25 = arith.cmpf ogt, %4, %24 : vector<8x8xf32>
    %26 = arith.extui %25 : vector<8x8xi1> to vector<8x8xi32>
    %27 = arith.sitofp %26 : vector<8x8xi32> to vector<8x8xf32>
    %cst_9 = arith.constant 2.000000e+00 : f32
    %28 = vector.broadcast %cst_9 : f32 to vector<8x8xf32>
    %29 = arith.mulf %27, %28 : vector<8x8xf32>
    %cst_10 = arith.constant 1.000000e+00 : f32
    %30 = vector.broadcast %cst_10 : f32 to vector<8x8xf32>
    %31 = arith.subf %29, %30 : vector<8x8xf32>
    %32 = arith.mulf %23, %31 : vector<8x8xf32>
    %cst_11 = arith.constant 0.000000e+00 : f32
    %33 = vector.broadcast %cst_11 : f32 to vector<8x8xf32>
    %34 = arith.minimumf %32, %33 : vector<8x8xf32>
    %35 = math.absf %32 : vector<8x8xf32>
    %cst_12 = arith.constant 0.000000e+00 : f32
    %36 = vector.broadcast %cst_12 : f32 to vector<8x8xf32>
    %37 = arith.subf %36, %35 : vector<8x8xf32>
    %38 = math.exp %37 : vector<8x8xf32>
    %cst_13 = arith.constant 1.000000e+00 : f32
    %39 = vector.broadcast %cst_13 : f32 to vector<8x8xf32>
    %40 = arith.addf %39, %38 : vector<8x8xf32>
    %41 = math.log %40 : vector<8x8xf32>
    %42 = arith.subf %34, %41 : vector<8x8xf32>
    %cst_14 = arith.constant 2.000000e+00 : f32
    %43 = vector.broadcast %cst_14 : f32 to vector<8x8xf32>
    %44 = arith.mulf %42, %43 : vector<8x8xf32>
    %45 = math.exp %44 : vector<8x8xf32>
    %46 = arith.mulf %45, %21 : vector<8x8xf32>
    %c0_15 = arith.constant 0 : index
    %c0_16 = arith.constant 0 : index
    %47 = vector.load %arg5[%c0_15, %c0_16] : memref<1x8xf32, #tpu.memory_space<vmem>>, vector<1x8xf32>
    %cst_17 = arith.constant dense<0.000000e+00> : vector<8xf32>
    %48 = vector.multi_reduction <add>, %46, %cst_17 [0] : vector<8x8xf32> to vector<8xf32>
    %49 = vector.shape_cast %48 : vector<8xf32> to vector<1x8xf32>
    %50 = arith.addf %47, %49 : vector<1x8xf32>
    %c0_18 = arith.constant 0 : index
    %c0_19 = arith.constant 0 : index
    %51 = vector.load %arg5[%c0_18, %c0_19] : memref<1x8xf32, #tpu.memory_space<vmem>>, vector<1x8xf32>
    tpu.vector_store %arg5[%c0_18, %c0_19], %50 {strides = array<i32>} : memref<1x8xf32, #tpu.memory_space<vmem>>, vector<1x8xf32>,
    %c0_i32_20 = arith.constant 0 : i32
    %52 = arith.cmpi eq, %arg1, %c0_i32_20 : i32
    %53 = arith.extui %52 : i1 to i32
    %c0_i32_21 = arith.constant 0 : i32
    %54 = arith.cmpi ne, %53, %c0_i32_21 : i32
    scf.if %54 {
      %c0_22 = arith.constant 0 : index
      %c0_23 = arith.constant 0 : index
      %55 = vector.load %arg5[%c0_22, %c0_23] : memref<1x8xf32, #tpu.memory_space<vmem>>, vector<1x8xf32>
      %56 = vector.shape_cast %55 : vector<1x8xf32> to vector<1x1x8xf32>
      %c0_24 = arith.constant 0 : index
      %c0_25 = arith.constant 0 : index
      %c0_26 = arith.constant 0 : index
      %57 = vector.load %arg4[%c0_24, %c0_25, %c0_26] : memref<1x1x8xf32, #tpu.memory_space<vmem>>, vector<1x1x8xf32>
      tpu.vector_store %arg4[%c0_24, %c0_25, %c0_26], %56 {strides = array<i32>} : memref<1x1x8xf32, #tpu.memory_space<vmem>>, vector<1x1x8xf32>,
    } else {
    }
    return
  }
  func.func @transform_0(%arg0: i32, %arg1: i32) -> (i32, i32) {
    %c1_i32 = arith.constant 1 : i32
    %0 = arith.muli %arg0, %c1_i32 : i32
    %1 = arith.addi %0, %arg1 : i32
    %c0_i32 = arith.constant 0 : i32
    %c0_i32_0 = arith.constant 0 : i32
    return %1, %c0_i32 : i32, i32
  }
  func.func @transform_1(%arg0: i32, %arg1: i32) -> (i32, i32) {
    %c1_i32 = arith.constant 1 : i32
    %0 = arith.muli %arg0, %c1_i32 : i32
    %1 = arith.addi %0, %arg1 : i32
    %c0_i32 = arith.constant 0 : i32
    %c0_i32_0 = arith.constant 0 : i32
    return %1, %c0_i32 : i32, i32
  }
  func.func @transform_2(%arg0: i32, %arg1: i32) -> (i32, i32, i32) {
    %c0_i32 = arith.constant 0 : i32
    %c0_i32_0 = arith.constant 0 : i32
    %c0_i32_1 = arith.constant 0 : i32
    return %arg0, %c0_i32, %c0_i32_0 : i32, i32, i32
  }
}

</mosaic_0001>

<llo_original>
// kernel: tpu_custom_call.1
$region0: #{tpu_custom_call.1}
  #allocation0 [shape = 'u32[]', space=smem, size = 0x4, offset = 0x4, fixed_abs, tag = 'smem constant byte address 0x4 - core index']
  #allocation1 [shape = 'u32[144,128]{1,0:T(1,128)}', space=vmem, size = 0x12000, scoped, tag = 'internal scratch']
  #allocation2 [shape = 'f32[1,8]{1,0:T(1,128)}', space=vmem, size = 0x200, scoped, tag = 'scratch operand']
  %s0 = inlined_call_operand.vmem [shape: f32[16,8], index: 0, kind: input, shape index: {}]
  %s1 = inlined_call_operand.vmem [shape: f32[16,8], index: 1, kind: input, shape index: {}]
  %s2 = inlined_call_operand.hbm [shape: f32[2,1,8], index: 2, kind: output, shape index: {}]
  %s3 = sld [smem:[#allocation0]]
  $region49: #{tpu_custom_call.1} parent=0
    _
  %s5 = ssub.s32 1, %s3
  %s6 = scalar_select 0, %s5, %s3
  $region1: #{tpu_custom_call.1} parent=0
    #allocation3 [shape = 'u8[1024]{0}', space=vmem, size = 0x400, scoped, tag = 'output window, operand 0']
    #allocation4 [shape = 's32[2]{0}', space=sflag, size = 0x8, scoped, tag = 'scoped memory for tpu_custom_call.1']
    %7 = vsyncpa [#allocation4], 0
    %s8 = scalar_lea.sflag [#allocation4], 1
    %9 = vsyncpa %s8, 0
    loop: start=0, step=1, limit=4
    $region2: #{tpu_custom_call.1} parent=1 // loop_pre_header
      _
    $region3: #{tpu_custom_call.1} parent=1 // loop_header
      %s11 = sphi 0, %s15
      %p12 = scmp.ge.s32.totalorder %s11, 4
      %s18 = sphi 0, %s30
      %s19 = sphi 0, %s26
      %s20 = sphi 0, %s18
      %s21 = sphi 0, %s19
      %s22 = sphi 0, %s20
      %s23 = sphi 0, %s21
      %s35 = sphi 0, %s37
      %s38 = sphi 0, %s35
      %s39 = sphi 0, %s38
      %s55 = sphi 0, %s39
      %s63 = sphi 0, %s65
      %s66 = sphi 0, %s63
      %s67 = sphi 0, %s66
      %s83 = sphi 0, %s67
      %s89 = sphi 0, %s91
      %s92 = sphi 0, %s89
      %s93 = sphi 0, %s92
      %s109 = sphi 0, %s93
    $region4: #{tpu_custom_call.1} parent=1 // loop_header_branch
      %14 = sbr.rel (%p12) target = $region8
    $region5: #{tpu_custom_call.1} parent=1 // loop_body
      %s16 = ssub.s32 %s11, 1
      %s17 = ssub.s32 %s11, 2
      %s24 = sadd.s32 1, %s19
      %p25 = scmp.ge.s32.totalorder %s24, 1
      %s26 = scalar_select %p25, 0, %s24
      %s27 = sadd.s32 1, %s18
      %s28 = scalar_select %p25, %s27, %s18
      %p29 = scmp.ge.s32.totalorder %s28, 2
      %s30 = scalar_select %p29, 0, %s28
      %s31 = sadd.s32 %s18, %s19
      %s32 = sadd.s32 %s30, %s26
      %s33 = ssub.s32 %s31, %s32
      %p34 = scmp.eq.s32.totalorder %s33, 0
      %s36 = sadd.s32 %s35, 1
      %s37 = scalar_select %p34, %s35, %s36
      %p40 = pneg %p34
      %p41 = scmp.eq.s32.totalorder %s11, 1
      %p42 = por %p40, %p41
      %p43 = scmp.ne.s32.totalorder %s35, %s38
      %p44 = scmp.eq.s32.totalorder %s11, 0
      %p45 = por %p43, %p44
      %p46 = scmp.ne.s32.totalorder %s35, %s38
      %p47 = scmp.eq.s32.totalorder %s16, 1
      %p48 = por %p46, %p47
      %p49 = scmp.ne.s32.totalorder %s38, %s39
      %p50 = scmp.eq.s32.totalorder %s16, 0
      %p51 = por %p49, %p50
      %p52 = scmp.ne.s32.totalorder %s38, %s39
      %p53 = scmp.eq.s32.totalorder %s17, 1
      %p54 = por %p52, %p53
      %p56 = scmp.ne.s32.totalorder %s39, %s55
      %p57 = scmp.eq.s32.totalorder %s17, 0
      %p58 = por %p56, %p57
      %s59 = sadd.s32 %s18, %s19
      %s60 = sadd.s32 %s30, %s26
      %s61 = ssub.s32 %s59, %s60
      %p62 = scmp.eq.s32.totalorder %s61, 0
      %s64 = sadd.s32 %s63, 1
      %s65 = scalar_select %p62, %s63, %s64
      %p68 = pneg %p62
      %p69 = scmp.eq.s32.totalorder %s11, 1
      %p70 = por %p68, %p69
      %p71 = scmp.ne.s32.totalorder %s63, %s66
      %p72 = scmp.eq.s32.totalorder %s11, 0
      %p73 = por %p71, %p72
      %p74 = scmp.ne.s32.totalorder %s63, %s66
      %p75 = scmp.eq.s32.totalorder %s16, 1
      %p76 = por %p74, %p75
      %p77 = scmp.ne.s32.totalorder %s66, %s67
      %p78 = scmp.eq.s32.totalorder %s16, 0
      %p79 = por %p77, %p78
      %p80 = scmp.ne.s32.totalorder %s66, %s67
      %p81 = scmp.eq.s32.totalorder %s17, 1
      %p82 = por %p80, %p81
      %p84 = scmp.ne.s32.totalorder %s67, %s83
      %p85 = scmp.eq.s32.totalorder %s17, 0
      %p86 = por %p84, %p85
      %s87 = ssub.s32 %s18, %s30
      %p88 = scmp.eq.s32.totalorder %s87, 0
      %s90 = sadd.s32 %s89, 1
      %s91 = scalar_select %p88, %s89, %s90
      %p94 = pneg %p88
      %p95 = scmp.eq.s32.totalorder %s11, 1
      %p96 = por %p94, %p95
      %p97 = scmp.ne.s32.totalorder %s89, %s92
      %p98 = scmp.eq.s32.totalorder %s11, 0
      %p99 = por %p97, %p98
      %p100 = scmp.ne.s32.totalorder %s89, %s92
      %p101 = scmp.eq.s32.totalorder %s16, 1
      %p102 = por %p100, %p101
      %p103 = scmp.ne.s32.totalorder %s92, %s93
      %p104 = scmp.eq.s32.totalorder %s16, 0
      %p105 = por %p103, %p104
      %p106 = scmp.ne.s32.totalorder %s92, %s93
      %p107 = scmp.eq.s32.totalorder %s17, 1
      %p108 = por %p106, %p107
      %p110 = scmp.ne.s32.totalorder %s93, %s109
      %p111 = scmp.eq.s32.totalorder %s17, 0
      %p112 = por %p110, %p111
      %p113 = scmp.le.s32.totalorder 1, %s11
      %p114 = scmp.lt.s32.totalorder %s11, 3
      %p115 = pnand %p113, %p114
      %p116 = pneg %p115
      // Predicated region
      $region9: #{tpu_custom_call.1} parent=5 // pred_check
        _
      $region10: #{tpu_custom_call.1} parent=5 // pred_check_branch
        %118 = sbr.rel (%p115) target = $region12
      $region11: #{tpu_custom_call.1} parent=5 // pred_region
        %s119 = ssub.s32 %s11, 1
      $region12: #{tpu_custom_call.1} parent=5 // pred_fallthru
        _
      %p120 = scmp.lt.s32.totalorder %s11, 2
      // Predicated region
      $region13: #{tpu_custom_call.1} parent=5 // pred_check
        %p121 = pneg %p120
      $region14: #{tpu_custom_call.1} parent=5 // pred_check_branch
        %123 = sbr.rel (%p121) target = $region16
      $region15: #{tpu_custom_call.1} parent=5 // pred_region
        // Predicated region
        $region17: #{tpu_custom_call.1} parent=15 // pred_check
          %p124 = pneg %p45
        $region18: #{tpu_custom_call.1} parent=15 // pred_check_branch
          %126 = sbr.rel (%p124) target = $region20
        $region19: #{tpu_custom_call.1} parent=15 // pred_region
          %s127 = sadd.s32 %s18, %s19
          %p128 = scmp.lt.s32.totalorder %s127, 1
          %s129 = scalar_select %p128, %s127, 1
          %s130 = smul.addr %s129, 8
          %s131 = scalar_lea.vmem %s0, %s130
          %s132 = sadd.s32 %s18, %s19
        $region20: #{tpu_custom_call.1} parent=15 // pred_fallthru
          _
        // Predicated region
        $region21: #{tpu_custom_call.1} parent=15 // pred_check
          %p133 = pneg %p73
        $region22: #{tpu_custom_call.1} parent=15 // pred_check_branch
          %135 = sbr.rel (%p133) target = $region24
        $region23: #{tpu_custom_call.1} parent=15 // pred_region
          %s136 = sadd.s32 %s18, %s19
          %p137 = scmp.lt.s32.totalorder %s136, 1
          %s138 = scalar_select %p137, %s136, 1
          %s139 = smul.addr %s138, 8
          %s140 = scalar_lea.vmem %s1, %s139
          %s141 = sadd.s32 %s18, %s19
        $region24: #{tpu_custom_call.1} parent=15 // pred_fallthru
          _
      $region16: #{tpu_custom_call.1} parent=5 // pred_fallthru
        _
      %p142 = scmp.le.s32.totalorder 1, %s11
      %p143 = scmp.lt.s32.totalorder %s11, 3
      %p144 = pnand %p142, %p143
      %p145 = pneg %p144
      // Predicated region
      $region25: #{tpu_custom_call.1} parent=5 // pred_check
        _
      $region26: #{tpu_custom_call.1} parent=5 // pred_check_branch
        %147 = sbr.rel (%p144) target = $region28
      $region27: #{tpu_custom_call.1} parent=5 // pred_region
        %s148 = ssub.s32 %s11, 1
        %s149 = sadd.s32 %s20, %s21
        %p150 = scmp.lt.s32.totalorder %s149, 1
        %s151 = scalar_select %p150, %s149, 1
        %s152 = smul.addr %s151, 8
        %s153 = scalar_lea.vmem %s0, %s152
        %p154 = pneg %p51
        %p155 = pneg %p48
        %s156 = sadd.s32 %s20, %s21
        %p157 = scmp.lt.s32.totalorder %s156, 1
        %s158 = scalar_select %p157, %s156, 1
        %s159 = smul.addr %s158, 8
        %s160 = scalar_lea.vmem %s1, %s159
        %p161 = pneg %p79
        %p162 = pneg %p76
        %p163 = pneg %p105
        %p164 = pneg %p102
        %s165 = sand.u32 %s92, 1
        %s166 = scalar_lea.sflag [#allocation4], %s165
        %s167 = sand.u32 %s92, 1
        %s168 = scalar_lea.vmem [#allocation3], %s167
        %s169 = sadd.s32 %s20, %s21
        %p170 = scmp.lt.s32.totalorder %s169, 1
        %s171 = scalar_select %p170, %s169, 1
        %s172 = smul.addr %s171, 8
        %s173 = scalar_lea.vmem %s0, %s172
        %s174 = sadd.s32 %s20, %s21
        %s175 = sadd.s32 %s20, %s21
        %p176 = scmp.lt.s32.totalorder %s175, 1
        %s177 = scalar_select %p176, %s175, 1
        %s178 = smul.addr %s177, 8
        %s179 = scalar_lea.vmem %s1, %s178
        %s180 = sadd.s32 %s20, %s21
        %p181 = scmp.eq.s32.totalorder %s21, 0
        // Predicated region
        $region29: #{tpu_custom_call.1} parent=27 // pred_check
          %p182 = pneg %p181
        $region30: #{tpu_custom_call.1} parent=27 // pred_check_branch
          %184 = sbr.rel (%p182) target = $region32
        $region31: #{tpu_custom_call.1} parent=27 // pred_region
          %vm185 = vcmask 57344
          %186 = vst.msk [vmem:[#allocation2] sm:$0x1] %vm185, 0.0
        $region32: #{tpu_custom_call.1} parent=27 // pred_fallthru
          _
        %v187 = vld [vmem:[%s173] sm:$0xff]
        %v188 = vld [vmem:[%s179] sm:$0xff]
        %v189 = vsub.f32 0.0, %v187
        %v190 = vmax.f32 %v189, 0.0
        %v191 = vmul.f32 %v187, %v188
        %v192 = vsub.f32 %v187, %v191
        %v193 = vadd.f32 %v192, %v190
        %v194 = vsub.f32 0.0, %v190
        %v195 = vmul.f32 %v194, 1.442695
        %v196 = vpow.pop %v195
        %v197 = vsub.f32 %v189, %v190
        %v198 = vmul.f32 %v197, 1.442695
        %v199 = vpow.pop %v198
        %v200 = vadd.f32 %v196, %v199
        %v201 = vlog2.pop %v200
        %v202 = vmul.f32 %v201, 0.6931472
        %v203 = vadd.f32 %v193, %v202
        %vm204 = vcmp.gt.f32.partialorder %v188, 0.5
        %v205 = vsel %vm204, 1, 0
        %v206 = vcvt.s32.f32 %v205
        %v207 = vmul.f32 %v206, 2.0
        %v208 = vsub.f32 %v207, 1.0
        %v209 = vmul.f32 %v189, %v208
        %v210 = vmin.f32 %v209, 0.0
        %v211 = vand.u32 2147483647, %v209
        %v212 = vsub.f32 0.0, %v211
        %v213 = vmul.f32 %v212, 1.442695
        %v214 = vpow.pop %v213
        %v215 = vadd.f32 %v214, 1.0
        %v216 = vlog2.pop %v215
        %v217 = vmul.f32 %v216, 0.6931472
        %v218 = vsub.f32 %v210, %v217
        %v219 = vmul.f32 %v218, 2.0
        %v220 = vmul.f32 %v219, 1.442695
        %v221 = vpow.pop %v220
        %v222 = vmul.f32 %v221, %v203
        %v223 = vld [vmem:[#allocation2] sm:$0x1]
        %vm224 = vcmask 64512
        %v225 = vsel %vm224, %v222, 0.0
        %v226 = vrot.slane %v225, 4
        %v227 = vadd.f32 %v225, %v226
        %v228 = vrot.slane %v227, 2
        %v229 = vadd.f32 %v227, %v228
        %v230 = vrot.slane %v229, 1
        %v231 = vadd.f32 %v229, %v230
        %v232 = vadd.f32 %v223, %v231
        %vm233 = vcmask 57344
        %234 = vst.msk [vmem:[#allocation2] sm:$0x1] %vm233, %v232
        // Predicated region
        $region33: #{tpu_custom_call.1} parent=27 // pred_check
          %p235 = pneg %p181
        $region34: #{tpu_custom_call.1} parent=27 // pred_check_branch
          %237 = sbr.rel (%p235) target = $region36
        $region35: #{tpu_custom_call.1} parent=27 // pred_region
          %v238 = vld [vmem:[#allocation2] sm:$0x1]
          %239 = vst.msk [vmem:[%s168] sm:$0x1] %vm233, %v238
        $region36: #{tpu_custom_call.1} parent=27 // pred_fallthru
          _
        %s240 = sand.u32 %s92, 1
        %s241 = scalar_lea.sflag [#allocation4], %s240
        %s242 = sand.u32 %s92, 1
        %s243 = scalar_lea.vmem [#allocation3], %s242
        // Predicated region
        $region37: #{tpu_custom_call.1} parent=27 // pred_check
          %p244 = pneg %p102
        $region38: #{tpu_custom_call.1} parent=27 // pred_check_branch
          %246 = sbr.rel (%p244) target = $region40
        $region39: #{tpu_custom_call.1} parent=27 // pred_region
          %s248 = ssub.s32 16, 16
          %249 = vsyncadd %s241, %s248
          %s250 = smul.addr %s20, 16
          %s251 = scalar_lea.hbm %s2, %s250
          %s253 = sshll.u32 %s243, 4
          %s254 = int_to_ptr.vmem [resolvable:$true] %s253
          %256 = dma.vmem_to_hbm [thread:$0]  %s254, 16, %s251, %s241
        $region40: #{tpu_custom_call.1} parent=27 // pred_fallthru
          _
      $region28: #{tpu_custom_call.1} parent=5 // pred_fallthru
        _
      %p257 = scmp.le.s32.totalorder 2, %s11
      // Predicated region
      $region41: #{tpu_custom_call.1} parent=5 // pred_check
        %p258 = pneg %p257
      $region42: #{tpu_custom_call.1} parent=5 // pred_check_branch
        %260 = sbr.rel (%p258) target = $region44
      $region43: #{tpu_custom_call.1} parent=5 // pred_region
        %s261 = ssub.s32 %s11, 2
        // Predicated region
        $region45: #{tpu_custom_call.1} parent=43 // pred_check
          %p262 = pneg %p108
        $region46: #{tpu_custom_call.1} parent=43 // pred_check_branch
          %264 = sbr.rel (%p262) target = $region48
        $region47: #{tpu_custom_call.1} parent=43 // pred_region
          %s265 = sand.u32 %s93, 1
          %s266 = scalar_lea.sflag [#allocation4], %s265
          %s267 = sand.u32 %s93, 1
          %s268 = scalar_lea.vmem [#allocation3], %s267
          %269 = dma.done %s266, 16
        $region48: #{tpu_custom_call.1} parent=43 // pred_fallthru
          _
      $region44: #{tpu_custom_call.1} parent=5 // pred_fallthru
        _
    $region6: #{tpu_custom_call.1} parent=1 // loop_footer
      %s15 = sadd.s32 1, %s11
    $region7: #{tpu_custom_call.1} parent=1 // loop_footer_branch
      %10 = sbr.rel target = $region3
    $region8: #{tpu_custom_call.1} parent=1 // loop_exit
      _
    %270 = vsyncpa [#allocation4], 1
    %s271 = scalar_lea.sflag [#allocation4], 1
    %272 = vsyncpa %s271, 1

</llo_original>
